<compile_context>
chip_gen: v5e
topology: v5e:2x2
jax: 0.10.0
libtpu: 0.0.40
codegen_flags: <defaults>
</compile_context>

<pallas_src>
import functools

import jax
import jax.numpy as jnp
from jax.experimental import pallas as pl
from jax.experimental.pallas import tpu as pltpu


def _actor_fwd_kernel(
    x_ref,            # (obs_dim, TB)                 compute dtype (bf16/f32)
    w1_ref, b1_ref,   # (h1, obs_dim), (h1, 1)        weights compute dtype, bias f32
    w2_ref, b2_ref,   # (h2, h1),      (h2, 1)
    wh_ref, bh_ref,   # (2*act, h2),   (2*act, 1)     fused [mean | log_std] heads
    out_ref,          # (2*act, TB)    float32        batch on lanes
    *, action_dim,
):
    x = x_ref[...]

    # hidden layer 1: ReLU(W1 @ x + b1)   (f32 accumulation, f32 bias/ReLU)
    h = jnp.dot(w1_ref[...], x, preferred_element_type=jnp.float32)
    h = jnp.maximum(h + b1_ref[...], 0.0)

    # hidden layer 2: ReLU(W2 @ h + b2)
    h = jnp.dot(w2_ref[...], h.astype(w2_ref.dtype),
                preferred_element_type=jnp.float32)
    h = jnp.maximum(h + b2_ref[...], 0.0)

    # fused heads: one MXU push + one lane-dense store instead of two
    heads = jnp.dot(wh_ref[...], h.astype(wh_ref.dtype),
                    preferred_element_type=jnp.float32)
    heads = heads + bh_ref[...]

    # clamp only the log_std half (sublanes >= action_dim) to [-20, 10]
    row = jax.lax.broadcasted_iota(jnp.int32, heads.shape, 0)
    heads = jnp.where(row >= action_dim, jnp.clip(heads, -20.0, 10.0), heads)

    out_ref[...] = heads.astype(out_ref.dtype)


def _round_up(n, m):
    return ((n + m - 1) // m) * m


def _choose_batch_tile(batch, batch_tile):
    """Pick the lane (batch) tile size.

    Small batches run as a single exact-size block (a block dim equal to the
    full array dim is exempt from the 128-lane divisibility rule).  Large
    batches use a multiple-of-128 tile, capped so there are at least two grid
    steps (v7x megacore sharding); the ragged final tile is clipped by Pallas.
    """
    if batch <= 256:
        return batch
    tile = _round_up(max(batch_tile, 128), 128)
    half = _round_up(pl.cdiv(batch, 2), 128)
    return min(tile, half)


def actor_forward(x, params, *, batch_tile=2048, compute_dtype=jnp.bfloat16):
    """ActorNetwork.forward as a single fused Pallas TPU kernel.

    x: (batch, observation_dim) float32.
    params: dict from init_actor_params (weights (out, in), biases (out, 1),
            pre-fused heads 'wh'/'bh').
    Returns (mean, log_std), each (batch, action_dim) float32.
    """
    B, obs_dim = x.shape
    two_act, _ = params["wh"].shape
    act_dim = two_act // 2

    # Feature-major / lane-dense layout: the batch goes on the lane axis.
    xT = x.T.astype(compute_dtype)                  # (obs_dim, B)
    w1 = params["w1"].astype(compute_dtype)
    w2 = params["w2"].astype(compute_dtype)
    wh = params["wh"].astype(compute_dtype)
    b1, b2, bh = params["b1"], params["b2"], params["bh"]   # stay float32

    TB = _choose_batch_tile(B, batch_tile)
    grid = (pl.cdiv(B, TB),)

    def lane_tiled(rows):
        # batch-tile i selects lanes [i*TB, (i+1)*TB); ragged tail is clipped
        return pl.BlockSpec((rows, TB), lambda i: (0, i))

    def resident(a):
        # constant index_map: weights/biases stay resident across batch tiles
        return pl.BlockSpec(a.shape, lambda i: (0, 0))

    kernel = functools.partial(_actor_fwd_kernel, action_dim=act_dim)

    out = pl.pallas_call(
        kernel,
        out_shape=jax.ShapeDtypeStruct((two_act, B), jnp.float32),
        grid=grid,
        in_specs=[
            lane_tiled(obs_dim),
            resident(w1), resident(b1),
            resident(w2), resident(b2),
            resident(wh), resident(bh),
        ],
        out_specs=lane_tiled(two_act),
        compiler_params=pltpu.CompilerParams(
            dimension_semantics=("parallel",)),
    )(xT, w1, b1, w2, b2, wh, bh)

    mean = out[:act_dim, :].T
    log_std = out[act_dim:, :].T
    return mean, log_std


def init_actor_params(key, observation_dim, action_dim, hidden_sizes=(32, 32)):
    """nn.Linear-style init (uniform +/- 1/sqrt(fan_in)).

    Weights are stored PyTorch-style (out_features, in_features) so the kernel
    computes W @ x; biases are (out_features, 1) to broadcast over the lane
    (batch) axis.  The mean / log_std heads are fused once here ('wh', 'bh')
    instead of on every forward call.
    """
    sizes = [observation_dim] + list(hidden_sizes)
    keys = jax.random.split(key, 8)

    def linear(fan_in, fan_out, kw, kb):
        bound = 1.0 / (fan_in ** 0.5)
        w = jax.random.uniform(kw, (fan_out, fan_in), jnp.float32, -bound, bound)
        b = jax.random.uniform(kb, (fan_out, 1), jnp.float32, -bound, bound)
        return w, b

    params = {}
    params["w1"], params["b1"] = linear(sizes[0], sizes[1], keys[0], keys[1])
    params["w2"], params["b2"] = linear(sizes[1], sizes[2], keys[2], keys[3])
    wm, bm = linear(sizes[2], action_dim, keys[4], keys[5])
    ws, bs = linear(sizes[2], action_dim, keys[6], keys[7])
    params["wh"] = jnp.concatenate([wm, ws], axis=0)    # (2*act, h2)
    params["bh"] = jnp.concatenate([bm, bs], axis=0)    # (2*act, 1)
    return params


def actor_forward_ref(x, params, compute_dtype=None):
    """Pure-JAX reference matching the PyTorch forward.

    With compute_dtype=None everything is float32; otherwise the matmul inputs
    are cast exactly like the kernel (f32 accumulation / bias / ReLU / clamp),
    so the comparison against the bf16 kernel path stays tight.
    """
    w1, w2, wh = params["w1"], params["w2"], params["wh"]
    b1, b2, bh = params["b1"], params["b2"], params["bh"]
    act_dim = wh.shape[0] // 2
    cd = compute_dtype

    xT = x.T if cd is None else x.T.astype(cd)
    w1 = w1 if cd is None else w1.astype(cd)
    w2 = w2 if cd is None else w2.astype(cd)
    wh = wh if cd is None else wh.astype(cd)

    h = jnp.maximum(jnp.dot(w1, xT, preferred_element_type=jnp.float32) + b1, 0.0)
    h = h if cd is None else h.astype(cd)
    h = jnp.maximum(jnp.dot(w2, h, preferred_element_type=jnp.float32) + b2, 0.0)
    h = h if cd is None else h.astype(cd)
    heads = jnp.dot(wh, h, preferred_element_type=jnp.float32) + bh
    mean = heads[:act_dim].T
    log_std = jnp.clip(heads[act_dim:], -20.0, 10.0).T
    return mean, log_std


# TODO(synk): ActorNetwork.sample() (Normal.rsample + tanh squashing + log_prob)
# is not part of forward() and is left to the host-side JAX wrapper.

if __name__ == "__main__":
    key = jax.random.PRNGKey(0)
    k_param, k_x, k_x2 = jax.random.split(key, 3)

    batch = 8
    observation_dim = 16
    action_dim = 8
    hidden_sizes = (32, 32)

    params = init_actor_params(k_param, observation_dim, action_dim, hidden_sizes)
    x = jax.random.normal(k_x, (batch, observation_dim), jnp.float32)

    # --- small batch, full f32 path: exact check against the f32 reference ---
    mean, log_std = actor_forward(x, params, compute_dtype=jnp.float32)
    jax.block_until_ready((mean, log_std))
    mean_ref, log_std_ref = actor_forward_ref(x, params)
    assert mean.shape == (batch, action_dim)
    assert log_std.shape == (batch, action_dim)
    assert jnp.allclose(mean, mean_ref, atol=1e-5, rtol=1e-5)
    assert jnp.allclose(log_std, log_std_ref, atol=1e-5, rtol=1e-5)

    # --- small batch, bf16 MXU inputs (default): tight check vs matching-cast
    # reference, loose check vs the pure-f32 reference ------------------------
    mean_bf, log_std_bf = actor_forward(x, params)
    jax.block_until_ready((mean_bf, log_std_bf))
    mean_bfr, log_std_bfr = actor_forward_ref(x, params, compute_dtype=jnp.bfloat16)
    assert jnp.allclose(mean_bf, mean_bfr, atol=1e-4, rtol=1e-4)
    assert jnp.allclose(log_std_bf, log_std_bfr, atol=1e-4, rtol=1e-4)
    assert jnp.allclose(mean_bf, mean_ref, atol=5e-2, rtol=5e-2)
    assert jnp.allclose(log_std_bf, log_std_ref, atol=5e-2, rtol=5e-2)

    # --- larger, non-multiple-of-128 batch: 2-step "parallel" grid + ragged
    # final lane tile, with no wrapper padding or output batch slicing --------
    big_batch = 1000
    xb = jax.random.normal(k_x2, (big_batch, observation_dim), jnp.float32)
    mean_b_ref, log_std_b_ref = actor_forward_ref(xb, params)

    mean_b32, log_std_b32 = actor_forward(xb, params, compute_dtype=jnp.float32)
    jax.block_until_ready((mean_b32, log_std_b32))
    assert mean_b32.shape == (big_batch, action_dim)
    assert log_std_b32.shape == (big_batch, action_dim)
    assert jnp.allclose(mean_b32, mean_b_ref, atol=1e-5, rtol=1e-5)
    assert jnp.allclose(log_std_b32, log_std_b_ref, atol=1e-5, rtol=1e-5)

    mean_b, log_std_b = actor_forward(xb, params)   # bf16 default path
    jax.block_until_ready((mean_b, log_std_b))
    mean_b_bfr, log_std_b_bfr = actor_forward_ref(xb, params,
                                                  compute_dtype=jnp.bfloat16)
    assert jnp.allclose(mean_b, mean_b_bfr, atol=1e-4, rtol=1e-4)
    assert jnp.allclose(log_std_b, log_std_b_bfr, atol=1e-4, rtol=1e-4)
    assert jnp.allclose(mean_b, mean_b_ref, atol=5e-2, rtol=5e-2)
    assert jnp.allclose(log_std_b, log_std_b_ref, atol=5e-2, rtol=5e-2)

    print("KERNEL_OK")
</pallas_src>

<mosaic_0001>
module attributes {stable_mosaic.version = 11 : i64} {
  func.func @_actor_fwd_kernel(%arg0: i32, %arg1: memref<16x8xf32, #tpu.memory_space<vmem>>, %arg2: memref<32x16xf32, #tpu.memory_space<vmem>>, %arg3: memref<32x1xf32, #tpu.memory_space<vmem>>, %arg4: memref<32x32xf32, #tpu.memory_space<vmem>>, %arg5: memref<32x1xf32, #tpu.memory_space<vmem>>, %arg6: memref<16x32xf32, #tpu.memory_space<vmem>>, %arg7: memref<16x1xf32, #tpu.memory_space<vmem>>, %arg8: memref<16x8xf32, #tpu.memory_space<vmem>>) attributes {dimension_semantics = [#tpu.dimension_semantics<parallel>], iteration_bounds = array<i64: 1>, scalar_prefetch = 0 : i64, scratch_operands = 0 : i64, tpu.core_type = #tpu.core_type<tc>, window_params = [{transform_indices = @transform_0, window_bounds = array<i64: 16, 8>}, {pipeline_mode = #tpu.pipeline_mode<synchronous>, transform_indices = @transform_1, window_bounds = array<i64: 32, 16>}, {pipeline_mode = #tpu.pipeline_mode<synchronous>, transform_indices = @transform_2, window_bounds = array<i64: 32, 1>}, {pipeline_mode = #tpu.pipeline_mode<synchronous>, transform_indices = @transform_3, window_bounds = array<i64: 32, 32>}, {pipeline_mode = #tpu.pipeline_mode<synchronous>, transform_indices = @transform_4, window_bounds = array<i64: 32, 1>}, {pipeline_mode = #tpu.pipeline_mode<synchronous>, transform_indices = @transform_5, window_bounds = array<i64: 16, 32>}, {pipeline_mode = #tpu.pipeline_mode<synchronous>, transform_indices = @transform_6, window_bounds = array<i64: 16, 1>}, {transform_indices = @transform_7, window_bounds = array<i64: 16, 8>}]} {
    %c0 = arith.constant 0 : index
    %c0_0 = arith.constant 0 : index
    %0 = vector.load %arg1[%c0, %c0_0] : memref<16x8xf32, #tpu.memory_space<vmem>>, vector<16x8xf32>
    %c0_1 = arith.constant 0 : index
    %c0_2 = arith.constant 0 : index
    %1 = vector.load %arg2[%c0_1, %c0_2] : memref<32x16xf32, #tpu.memory_space<vmem>>, vector<32x16xf32>
    %cst = arith.constant dense<0.000000e+00> : vector<32x8xf32>
    %2 = tpu.matmul %1, %0, %cst {dimension_numbers = #tpu.dot_dimension_numbers<[1], [0], [0], [1], [0, 0, 1, 1], [], []>} : vector<32x16xf32>, vector<16x8xf32>, vector<32x8xf32> -> vector<32x8xf32>
    %c0_3 = arith.constant 0 : index
    %c0_4 = arith.constant 0 : index
    %3 = vector.load %arg3[%c0_3, %c0_4] : memref<32x1xf32, #tpu.memory_space<vmem>>, vector<32x1xf32>
    %4 = vector.broadcast %3 : vector<32x1xf32> to vector<32x8xf32>
    %5 = arith.addf %2, %4 : vector<32x8xf32>
    %cst_5 = arith.constant 0.000000e+00 : f32
    %6 = vector.broadcast %cst_5 : f32 to vector<32x8xf32>
    %7 = arith.maximumf %5, %6 : vector<32x8xf32>
    %c0_6 = arith.constant 0 : index
    %c0_7 = arith.constant 0 : index
    %8 = vector.load %arg4[%c0_6, %c0_7] : memref<32x32xf32, #tpu.memory_space<vmem>>, vector<32x32xf32>
    %cst_8 = arith.constant dense<0.000000e+00> : vector<32x8xf32>
    %9 = tpu.matmul %8, %7, %cst_8 {dimension_numbers = #tpu.dot_dimension_numbers<[1], [0], [0], [1], [0, 0, 1, 1], [], []>} : vector<32x32xf32>, vector<32x8xf32>, vector<32x8xf32> -> vector<32x8xf32>
    %c0_9 = arith.constant 0 : index
    %c0_10 = arith.constant 0 : index
    %10 = vector.load %arg5[%c0_9, %c0_10] : memref<32x1xf32, #tpu.memory_space<vmem>>, vector<32x1xf32>
    %11 = vector.broadcast %10 : vector<32x1xf32> to vector<32x8xf32>
    %12 = arith.addf %9, %11 : vector<32x8xf32>
    %cst_11 = arith.constant 0.000000e+00 : f32
    %13 = vector.broadcast %cst_11 : f32 to vector<32x8xf32>
    %14 = arith.maximumf %12, %13 : vector<32x8xf32>
    %c0_12 = arith.constant 0 : index
    %c0_13 = arith.constant 0 : index
    %15 = vector.load %arg6[%c0_12, %c0_13] : memref<16x32xf32, #tpu.memory_space<vmem>>, vector<16x32xf32>
    %cst_14 = arith.constant dense<0.000000e+00> : vector<16x8xf32>
    %16 = tpu.matmul %15, %14, %cst_14 {dimension_numbers = #tpu.dot_dimension_numbers<[1], [0], [0], [1], [0, 0, 1, 1], [], []>} : vector<16x32xf32>, vector<32x8xf32>, vector<16x8xf32> -> vector<16x8xf32>
    %c0_15 = arith.constant 0 : index
    %c0_16 = arith.constant 0 : index
    %17 = vector.load %arg7[%c0_15, %c0_16] : memref<16x1xf32, #tpu.memory_space<vmem>>, vector<16x1xf32>
    %18 = vector.broadcast %17 : vector<16x1xf32> to vector<16x8xf32>
    %19 = arith.addf %16, %18 : vector<16x8xf32>
    %20 = tpu.iota {dimensions = array<i32: 0>} : vector<16x8xi32>
    %c8_i32 = arith.constant 8 : i32
    %21 = vector.broadcast %c8_i32 : i32 to vector<16x8xi32>
    %22 = arith.cmpi sge, %20, %21 : vector<16x8xi32>
    %cst_17 = arith.constant -2.000000e+01 : f32
    %cst_18 = arith.constant 1.000000e+01 : f32
    %23 = vector.broadcast %cst_17 : f32 to vector<16x8xf32>
    %24 = arith.maximumf %23, %19 : vector<16x8xf32>
    %25 = vector.broadcast %cst_18 : f32 to vector<16x8xf32>
    %26 = arith.minimumf %25, %24 : vector<16x8xf32>
    %27 = arith.select %22, %26, %19 : vector<16x8xi1>, vector<16x8xf32>
    %c0_19 = arith.constant 0 : index
    %c0_20 = arith.constant 0 : index
    %28 = vector.load %arg8[%c0_19, %c0_20] : memref<16x8xf32, #tpu.memory_space<vmem>>, vector<16x8xf32>
    tpu.vector_store %arg8[%c0_19, %c0_20], %27 {strides = array<i32>} : memref<16x8xf32, #tpu.memory_space<vmem>>, vector<16x8xf32>,
    return
  }
  func.func @transform_0(%arg0: i32) -> (i32, i32) {
    %c0_i32 = arith.constant 0 : i32
    %c0_i32_0 = arith.constant 0 : i32
    return %c0_i32, %arg0 : i32, i32
  }
  func.func @transform_1(%arg0: i32) -> (i32, i32) {
    %c0_i32 = arith.constant 0 : i32
    %c0_i32_0 = arith.constant 0 : i32
    %c0_i32_1 = arith.constant 0 : i32
    return %c0_i32, %c0_i32_0 : i32, i32
  }
  func.func @transform_2(%arg0: i32) -> (i32, i32) {
    %c0_i32 = arith.constant 0 : i32
    %c0_i32_0 = arith.constant 0 : i32
    %c0_i32_1 = arith.constant 0 : i32
    return %c0_i32, %c0_i32_0 : i32, i32
  }
  func.func @transform_3(%arg0: i32) -> (i32, i32) {
    %c0_i32 = arith.constant 0 : i32
    %c0_i32_0 = arith.constant 0 : i32
    %c0_i32_1 = arith.constant 0 : i32
    return %c0_i32, %c0_i32_0 : i32, i32
  }
  func.func @transform_4(%arg0: i32) -> (i32, i32) {
    %c0_i32 = arith.constant 0 : i32
    %c0_i32_0 = arith.constant 0 : i32
    %c0_i32_1 = arith.constant 0 : i32
    return %c0_i32, %c0_i32_0 : i32, i32
  }
  func.func @transform_5(%arg0: i32) -> (i32, i32) {
    %c0_i32 = arith.constant 0 : i32
    %c0_i32_0 = arith.constant 0 : i32
    %c0_i32_1 = arith.constant 0 : i32
    return %c0_i32, %c0_i32_0 : i32, i32
  }
  func.func @transform_6(%arg0: i32) -> (i32, i32) {
    %c0_i32 = arith.constant 0 : i32
    %c0_i32_0 = arith.constant 0 : i32
    %c0_i32_1 = arith.constant 0 : i32
    return %c0_i32, %c0_i32_0 : i32, i32
  }
  func.func @transform_7(%arg0: i32) -> (i32, i32) {
    %c0_i32 = arith.constant 0 : i32
    %c0_i32_0 = arith.constant 0 : i32
    return %c0_i32, %arg0 : i32, i32
  }
}

</mosaic_0001>

<llo_original>
// kernel: tpu_custom_call.1
$region0: #{tpu_custom_call.1}
  #allocation0 [shape = 'u32[]', space=smem, size = 0x4, offset = 0x4, fixed_abs, tag = 'smem constant byte address 0x4 - core index']
  #allocation1 [shape = 'u32[72,128]{1,0:T(1,128)}', space=vmem, size = 0x9000, scoped, tag = 'internal scratch']
  %s0 = inlined_call_operand.vmem [shape: f32[16,8], index: 0, kind: input, shape index: {}]
  %s1 = inlined_call_operand.vmem [shape: f32[32,16], index: 1, kind: input, shape index: {}]
  %s2 = inlined_call_operand.vmem [shape: f32[32,1], index: 2, kind: input, shape index: {}]
  %s3 = inlined_call_operand.vmem [shape: f32[32,32], index: 3, kind: input, shape index: {}]
  %s4 = inlined_call_operand.vmem [shape: f32[32,1], index: 4, kind: input, shape index: {}]
  %s5 = inlined_call_operand.vmem [shape: f32[16,32], index: 5, kind: input, shape index: {}]
  %s6 = inlined_call_operand.vmem [shape: f32[16,1], index: 6, kind: input, shape index: {}]
  %s7 = inlined_call_operand.vmem [shape: f32[16,8], index: 7, kind: output, shape index: {}]
  %s8 = sld [smem:[#allocation0]]
  $region38: #{tpu_custom_call.1} parent=0
    _
  %s10 = ssub.s32 1, %s8
  %s11 = scalar_select 0, %s10, %s8
  // Predicated region
  $region2: #{tpu_custom_call.1} parent=0 // pred_check
    _
  $region3: #{tpu_custom_call.1} parent=0 // pred_check_branch
    %13 = sbr.rel (0) target = $region5
  $region4: #{tpu_custom_call.1} parent=0 // pred_region
    _
  $region5: #{tpu_custom_call.1} parent=0 // pred_fallthru
    _
  // Predicated region
  $region6: #{tpu_custom_call.1} parent=0 // pred_check
    _
  $region7: #{tpu_custom_call.1} parent=0 // pred_check_branch
    %15 = sbr.rel (0) target = $region9
  $region8: #{tpu_custom_call.1} parent=0 // pred_region
    _
  $region9: #{tpu_custom_call.1} parent=0 // pred_fallthru
    _
  // Predicated region
  $region10: #{tpu_custom_call.1} parent=0 // pred_check
    _
  $region11: #{tpu_custom_call.1} parent=0 // pred_check_branch
    %17 = sbr.rel (0) target = $region13
  $region12: #{tpu_custom_call.1} parent=0 // pred_region
    _
  $region13: #{tpu_custom_call.1} parent=0 // pred_fallthru
    _
  // Predicated region
  $region14: #{tpu_custom_call.1} parent=0 // pred_check
    _
  $region15: #{tpu_custom_call.1} parent=0 // pred_check_branch
    %19 = sbr.rel (0) target = $region17
  $region16: #{tpu_custom_call.1} parent=0 // pred_region
    _
  $region17: #{tpu_custom_call.1} parent=0 // pred_fallthru
    _
  // Predicated region
  $region18: #{tpu_custom_call.1} parent=0 // pred_check
    _
  $region19: #{tpu_custom_call.1} parent=0 // pred_check_branch
    %21 = sbr.rel (0) target = $region21
  $region20: #{tpu_custom_call.1} parent=0 // pred_region
    _
  $region21: #{tpu_custom_call.1} parent=0 // pred_fallthru
    _
  // Predicated region
  $region22: #{tpu_custom_call.1} parent=0 // pred_check
    _
  $region23: #{tpu_custom_call.1} parent=0 // pred_check_branch
    %23 = sbr.rel (0) target = $region25
  $region24: #{tpu_custom_call.1} parent=0 // pred_region
    _
  $region25: #{tpu_custom_call.1} parent=0 // pred_fallthru
    _
  // Predicated region
  $region26: #{tpu_custom_call.1} parent=0 // pred_check
    _
  $region27: #{tpu_custom_call.1} parent=0 // pred_check_branch
    %25 = sbr.rel (0) target = $region29
  $region28: #{tpu_custom_call.1} parent=0 // pred_region
    _
  $region29: #{tpu_custom_call.1} parent=0 // pred_fallthru
    _
  %v26 = vld [vmem:[%s0] sm:$0xff]
  %v27 = vld [vmem:[%s0 + $0x8] sm:$0xff]
  %v28 = vld [vmem:[%s1] sm:$0xff]
  %v29 = vld [vmem:[%s1 + $0x8] sm:$0xff]
  %v30 = vld [vmem:[%s1 + $0x10] sm:$0xff]
  %v31 = vld [vmem:[%s1 + $0x18] sm:$0xff]
  %v32 = vld [vmem:[%s2] sm:$0xff]
  %v33 = vld [vmem:[%s2 + $0x8] sm:$0xff]
  %v34 = vld [vmem:[%s2 + $0x10] sm:$0xff]
  %v35 = vld [vmem:[%s2 + $0x18] sm:$0xff]
  %37 = vset.pattern.permute.xlu0 0
  %38 = vperm.xlu0 %37, %v32
  %v39 = vpop.permute.xlu0 %38
  %42 = vset.pattern.permute.xlu0 0
  %43 = vperm.xlu0 %42, %v33
  %v44 = vpop.permute.xlu0 %43
  %47 = vset.pattern.permute.xlu0 0
  %48 = vperm.xlu0 %47, %v34
  %v49 = vpop.permute.xlu0 %48
  %52 = vset.pattern.permute.xlu0 0
  %53 = vperm.xlu0 %52, %v35
  %v54 = vpop.permute.xlu0 %53
  %vm56 = vcmask 130048
  %v58 = vsel %vm56, %v28, 0
  %v61 = vsel %vm56, %v29, 0
  %v64 = vsel %vm56, %v30, 0
  %v67 = vsel %vm56, %v31, 0
  %69 = vmatpush.msra.mxu0 0.0
  %70 = vmatpush.msra.mxu0 0.0
  %71 = vmatpush.msra.mxu0 0.0
  %72 = vmatpush.msra.mxu0 0.0
  %73 = vmatpush.msra.mxu0 0.0
  %74 = vmatpush.msra.mxu0 0.0
  %75 = vmatpush.msra.mxu0 0.0
  %76 = vmatpush.msra.mxu0 0.0
  %77 = vmatpush.msra.mxu0 0.0
  %78 = vmatpush.msra.mxu0 0.0
  %79 = vmatpush.msra.mxu0 0.0
  %80 = vmatpush.msra.mxu0 0.0
  %81 = vmatpush.msra.mxu0 0.0
  %82 = vmatpush.msra.mxu0 0.0
  %83 = vmatpush.msra.mxu0 %v27
  %84 = vmatpush.msra.mxu0 %v26
  %85 = vmatmul.f32.gmra.mxu0 %v58
  %v86 = vpop.f32.mrf.mxu0
  %v87 = vadd.f32 %v39, %v86
  %88 = vmatmul.f32.gmra.mxu0 %v61
  %v89 = vpop.f32.mrf.mxu0
  %v90 = vadd.f32 %v44, %v89
  %91 = vmatmul.f32.gmra.mxu0 %v64
  %v92 = vpop.f32.mrf.mxu0
  %v93 = vadd.f32 %v49, %v92
  %94 = vmatmul.f32.gmra.mxu0 %v67
  %v95 = vpop.f32.mrf.mxu0
  %v96 = vadd.f32 %v54, %v95
  %97 = vdwg.mxu0
  %v98 = vmax.f32 %v87, 0.0
  %v99 = vmax.f32 %v90, 0.0
  %v100 = vmax.f32 %v93, 0.0
  %v101 = vmax.f32 %v96, 0.0
  %v102 = vld [vmem:[%s3] sm:$0xff]
  %v103 = vld [vmem:[%s3 + $0x8] sm:$0xff]
  %v104 = vld [vmem:[%s3 + $0x10] sm:$0xff]
  %v105 = vld [vmem:[%s3 + $0x18] sm:$0xff]
  %v106 = vld [vmem:[%s4] sm:$0xff]
  %v107 = vld [vmem:[%s4 + $0x8] sm:$0xff]
  %v108 = vld [vmem:[%s4 + $0x10] sm:$0xff]
  %v109 = vld [vmem:[%s4 + $0x18] sm:$0xff]
  %111 = vset.pattern.permute.xlu0 0
  %112 = vperm.xlu0 %111, %v106
  %v113 = vpop.permute.xlu0 %112
  %116 = vset.pattern.permute.xlu0 0
  %117 = vperm.xlu0 %116, %v107
  %v118 = vpop.permute.xlu0 %117
  %121 = vset.pattern.permute.xlu0 0
  %122 = vperm.xlu0 %121, %v108
  %v123 = vpop.permute.xlu0 %122
  %126 = vset.pattern.permute.xlu0 0
  %127 = vperm.xlu0 %126, %v109
  %v128 = vpop.permute.xlu0 %127
  %vm130 = vcmask 261120
  %v132 = vsel %vm130, %v102, 0
  %v135 = vsel %vm130, %v103, 0
  %v138 = vsel %vm130, %v104, 0
  %v141 = vsel %vm130, %v105, 0
  %143 = vmatpush.msra.mxu0 0.0
  %144 = vmatpush.msra.mxu0 0.0
  %145 = vmatpush.msra.mxu0 0.0
  %146 = vmatpush.msra.mxu0 0.0
  %147 = vmatpush.msra.mxu0 0.0
  %148 = vmatpush.msra.mxu0 0.0
  %149 = vmatpush.msra.mxu0 0.0
  %150 = vmatpush.msra.mxu0 0.0
  %151 = vmatpush.msra.mxu0 0.0
  %152 = vmatpush.msra.mxu0 0.0
  %153 = vmatpush.msra.mxu0 0.0
  %154 = vmatpush.msra.mxu0 0.0
  %155 = vmatpush.msra.mxu0 %v101
  %156 = vmatpush.msra.mxu0 %v100
  %157 = vmatpush.msra.mxu0 %v99
  %158 = vmatpush.msra.mxu0 %v98
  %159 = vmatmul.f32.gmra.mxu0 %v132
  %v160 = vpop.f32.mrf.mxu0
  %v161 = vadd.f32 %v113, %v160
  %162 = vmatmul.f32.gmra.mxu0 %v135
  %v163 = vpop.f32.mrf.mxu0
  %v164 = vadd.f32 %v118, %v163
  %165 = vmatmul.f32.gmra.mxu0 %v138
  %v166 = vpop.f32.mrf.mxu0
  %v167 = vadd.f32 %v123, %v166
  %168 = vmatmul.f32.gmra.mxu0 %v141
  %v169 = vpop.f32.mrf.mxu0
  %v170 = vadd.f32 %v128, %v169
  %171 = vdwg.mxu0
  %v172 = vmax.f32 %v161, 0.0
  %v173 = vmax.f32 %v164, 0.0
  %v174 = vmax.f32 %v167, 0.0
  %v175 = vmax.f32 %v170, 0.0
  %v176 = vld [vmem:[%s5] sm:$0xff]
  %v177 = vld [vmem:[%s5 + $0x8] sm:$0xff]
  %v178 = vld [vmem:[%s6] sm:$0xff]
  %v179 = vld [vmem:[%s6 + $0x8] sm:$0xff]
  %181 = vset.pattern.permute.xlu0 0
  %182 = vperm.xlu0 %181, %v178
  %v183 = vpop.permute.xlu0 %182
  %186 = vset.pattern.permute.xlu0 0
  %187 = vperm.xlu0 %186, %v179
  %v188 = vpop.permute.xlu0 %187
  %v191 = vsel %vm130, %v176, 0
  %v194 = vsel %vm130, %v177, 0
  %196 = vmatpush.msra.mxu0 0.0
  %197 = vmatpush.msra.mxu0 0.0
  %198 = vmatpush.msra.mxu0 0.0
  %199 = vmatpush.msra.mxu0 0.0
  %200 = vmatpush.msra.mxu0 0.0
  %201 = vmatpush.msra.mxu0 0.0
  %202 = vmatpush.msra.mxu0 0.0
  %203 = vmatpush.msra.mxu0 0.0
  %204 = vmatpush.msra.mxu0 0.0
  %205 = vmatpush.msra.mxu0 0.0
  %206 = vmatpush.msra.mxu0 0.0
  %207 = vmatpush.msra.mxu0 0.0
  %208 = vmatpush.msra.mxu0 %v175
  %209 = vmatpush.msra.mxu0 %v174
  %210 = vmatpush.msra.mxu0 %v173
  %211 = vmatpush.msra.mxu0 %v172
  %212 = vmatmul.f32.gmra.mxu0 %v191
  %v213 = vpop.f32.mrf.mxu0
  %v214 = vadd.f32 %v183, %v213
  %215 = vmatmul.f32.gmra.mxu0 %v194
  %v216 = vpop.f32.mrf.mxu0
  %v217 = vadd.f32 %v188, %v216
  %218 = vdwg.mxu0
  %v219 = vlaneseq
  %v220 = vshrl.u32 %v219, 7
  %v221 = vadd.s32 %v220, 8
  %vm222 = vcmp.ge.s32.totalorder %v220, 8
  %vm223 = vcmp.ge.s32.totalorder %v221, 8
  %v224 = vmax.f32 %v214, -20.0
  %v225 = vmax.f32 %v217, -20.0
  %v226 = vmin.f32 %v224, 10.0
  %v227 = vmin.f32 %v225, 10.0
  %v228 = vsel %vm222, %v226, %v214
  %v229 = vsel %vm223, %v227, %v217
  %vm230 = vcmask 64512
  %231 = vst.msk [vmem:[%s7] sm:$0xff] %vm230, %v228
  %232 = vst.msk [vmem:[%s7 + $0x8] sm:$0xff] %vm230, %v229
  // Predicated region
  $region30: #{tpu_custom_call.1} parent=0 // pred_check
    _
  $region31: #{tpu_custom_call.1} parent=0 // pred_check_branch
    %234 = sbr.rel (0) target = $region33
  $region32: #{tpu_custom_call.1} parent=0 // pred_region
    _
  $region33: #{tpu_custom_call.1} parent=0 // pred_fallthru
    _
  // Predicated region
  $region34: #{tpu_custom_call.1} parent=0 // pred_check
    _
  $region35: #{tpu_custom_call.1} parent=0 // pred_check_branch
    %236 = sbr.rel (0) target = $region37
  $region36: #{tpu_custom_call.1} parent=0 // pred_region
    _
  $region37: #{tpu_custom_call.1} parent=0 // pred_fallthru
    _

</llo_original>
